<compile_context>
chip_gen: v5e
topology: v5e:2x2
jax: 0.10.0
libtpu: 0.0.40
codegen_flags: <defaults>
</compile_context>

<pallas_src>
import functools

import jax
import jax.numpy as jnp
from jax import lax
from jax.experimental import pallas as pl
from jax.experimental.pallas import tpu as pltpu

LANE = 128
SUBLANE = 8
_MAX_UNROLL_LAYERS = 8  # deeper nets use an in-kernel fori_loop over layers


def _round_up(x: int, m: int) -> int:
    return (x + m - 1) // m * m


def _fcnet_fused_kernel(x_ref, w_ref, b_ref, o_ref, *, num_layers: int,
                        use_bf16_matmul: bool):
    """One batch tile through the whole MLP.

    x_ref: (TB, F) f32          -- lane-dense activations (F = 128-padded features)
    w_ref: (L, F, F) f32|bf16   -- zero-padded weights, VMEM-resident, single-buffered
    b_ref: (L, 1, F) f32        -- zero-padded biases, single lane-aligned slab
    o_ref: (TB, F) f32          -- lane-dense output slab (wrapper slices valid cols)
    """
    h = x_ref[...].astype(jnp.float32)

    def layer(h, w_l, b_l, relu):
        lhs = h.astype(jnp.bfloat16) if use_bf16_matmul else h
        y = jnp.dot(lhs, w_l, preferred_element_type=jnp.float32)
        y = y + b_l                       # (TB, F) + (1, F)
        if relu:
            y = jnp.maximum(y, 0.0)       # ReLU on hidden layers only
        return y

    if num_layers <= _MAX_UNROLL_LAYERS:
        # Tiny static trip count -> unrolled (LLO scheduler sees everything).
        for l in range(num_layers):
            h = layer(h, w_ref[l], b_ref[l], relu=(l < num_layers - 1))
    else:
        # Deep config: visible loop bounds live ranges; dynamic first-axis ref index.
        def body(l, h):
            return layer(h, w_ref[l], b_ref[l], relu=True)

        h = lax.fori_loop(0, num_layers - 1, body, h)
        h = layer(h, w_ref[num_layers - 1], b_ref[num_layers - 1], relu=False)

    o_ref[...] = h.astype(o_ref.dtype)


def pack_fcnet_params(params, *, weight_dtype=jnp.float32):
    """Zero-pad each layer's (W, b) to a common lane-aligned width and stack them
    into one (L, F, F) weight slab (optionally pre-cast to bf16) and one (L, 1, F)
    f32 bias slab."""
    dims = [params[0][0].shape[0]] + [w.shape[1] for w, _ in params]
    feat = _round_up(max(dims), LANE)
    w_stack = jnp.stack([
        jnp.pad(w.astype(weight_dtype),
                ((0, feat - w.shape[0]), (0, feat - w.shape[1])))
        for w, _ in params
    ])
    b_stack = jnp.stack([
        jnp.pad(b.astype(jnp.float32), (0, feat - b.shape[0]))[None, :]
        for _, b in params
    ])
    return w_stack, b_stack, feat


def _pick_batch_tile(B: int, max_batch_tile: int, align: int):
    """Sublane-aligned batch tile with minimal padding; >=2 tiles when B allows so
    v7x's two TensorCores both get work under dimension_semantics=('parallel',)."""
    assert max_batch_tile % align == 0 and max_batch_tile >= align, (
        f"max_batch_tile={max_batch_tile} must be a positive multiple of {align}")
    num_tiles = max(1, pl.cdiv(B, max_batch_tile))
    if B >= 2 * align and num_tiles < 2:
        num_tiles = 2
    tb = min(_round_up(pl.cdiv(B, num_tiles), align), max_batch_tile)
    num_tiles = pl.cdiv(B, tb)
    return tb, num_tiles * tb


def fcnet_forward(params, x, *, max_batch_tile: int = 256,
                  use_bf16_matmul: bool = False):
    """Forward pass of FCNet: Linear+ReLU stack, final Linear with no activation."""
    B, Din = x.shape
    Dout = params[-1][0].shape[1]
    num_layers = len(params)

    weight_dtype = jnp.bfloat16 if use_bf16_matmul else jnp.float32
    w_stack, b_stack, feat = pack_fcnet_params(params, weight_dtype=weight_dtype)

    # bf16 activations pack 2 rows per sublane -> keep tb a multiple of 16.
    align = 2 * SUBLANE if use_bf16_matmul else SUBLANE
    tb, b_pad = _pick_batch_tile(B, max_batch_tile, align)

    # Single pad of the batch remainder + feature tail (no full zeros+set pass).
    x_pad = jnp.pad(x, ((0, b_pad - B), (0, feat - Din)))

    # VMEM budget: single-buffered weight/bias slabs + double-buffered in/out tiles
    # + f32 compute temporaries. Raise the scoped limit only when needed; cap below
    # v7x's 64 MiB physical VMEM.
    w_bytes = num_layers * feat * feat * jnp.dtype(weight_dtype).itemsize
    b_bytes = num_layers * feat * 4
    act_bytes = tb * feat * 4
    vmem_est = w_bytes + b_bytes + 4 * act_bytes + 2 * act_bytes
    vmem_limit = None
    vmem_with_margin = int(vmem_est * 1.5) + (1 << 20)
    if vmem_with_margin > (16 << 20):
        vmem_limit = min(vmem_with_margin, 60 << 20)

    kernel = functools.partial(_fcnet_fused_kernel, num_layers=num_layers,
                               use_bf16_matmul=use_bf16_matmul)
    out_pad = pl.pallas_call(
        kernel,
        out_shape=jax.ShapeDtypeStruct((b_pad, feat), x.dtype),
        grid_spec=pltpu.PrefetchScalarGridSpec(
            num_scalar_prefetch=0,
            grid=(b_pad // tb,),
            in_specs=[
                # Activations: double-buffered batch tiles.
                pl.BlockSpec((tb, feat), lambda i: (i, 0)),
                # Weights/biases: constant index map -> VMEM-resident across tiles;
                # single-buffered (no point double-buffering a block that never moves).
                pl.BlockSpec((num_layers, feat, feat), lambda i: (0, 0, 0),
                             pipeline_mode=pl.Buffered(1)),
                pl.BlockSpec((num_layers, 1, feat), lambda i: (0, 0, 0),
                             pipeline_mode=pl.Buffered(1)),
            ],
            out_specs=pl.BlockSpec((tb, feat), lambda i: (i, 0)),
        ),
        compiler_params=pltpu.CompilerParams(
            dimension_semantics=("parallel",),   # v7x: shard batch tiles over 2 TCs
            vmem_limit_bytes=vmem_limit,
        ),
    )(x_pad, w_stack, b_stack)
    return out_pad[:B, :Dout]


def init_fcnet_params(key, input_dim, hidden_dim, num_hidden_layers, output_dim):
    """Deterministic parameter init mirroring the nn.Linear shapes in FCNet.__init__."""
    dims = [input_dim] + [hidden_dim] * num_hidden_layers + [output_dim]
    params = []
    for i in range(len(dims) - 1):
        key, kw, kb = jax.random.split(key, 3)
        fan_in = dims[i]
        bound = 1.0 / jnp.sqrt(fan_in)  # matches torch.nn.Linear default init
        w = jax.random.uniform(kw, (dims[i], dims[i + 1]), jnp.float32, -bound, bound)
        b = jax.random.uniform(kb, (dims[i + 1],), jnp.float32, -bound, bound)
        params.append((w, b))
    return params


def fcnet_ref(params, x):
    """Pure-JAX reference (full-f32 matmuls) for correctness checking."""
    n = len(params)
    h = x
    for i, (w, b) in enumerate(params):
        h = jnp.dot(h, w, precision=lax.Precision.HIGHEST) + b
        if i != n - 1:
            h = jnp.maximum(h, 0.0)
    return h


if __name__ == "__main__":
    input_dim = 16
    hidden = 32          # hidden_dim in the reference script
    num_hidden_layers = 3
    output_dim = 4

    key = jax.random.PRNGKey(0)
    key, kx, kx2, kd = jax.random.split(key, 4)
    params = init_fcnet_params(key, input_dim, hidden, num_hidden_layers, output_dim)

    # Case 1: shipped config (B=8 -> single batch tile), f32 path.
    x8 = jax.random.normal(kx, (8, input_dim), jnp.float32)
    out = jax.block_until_ready(jax.jit(fcnet_forward)(params, x8))
    assert out.shape == (8, output_dim)
    assert jnp.allclose(out, fcnet_ref(params, x8), atol=1e-4, rtol=1e-4)

    # Case 2: ragged batch (B=20) -> two balanced batch tiles + remainder padding.
    x20 = jax.random.normal(kx2, (20, input_dim), jnp.float32)
    out20 = jax.block_until_ready(jax.jit(fcnet_forward)(params, x20))
    assert out20.shape == (20, output_dim)
    assert jnp.allclose(out20, fcnet_ref(params, x20), atol=1e-4, rtol=1e-4)

    # Case 3: bf16-weight MXU path (pre-cast slab, f32 accumulate), relaxed tolerance.
    fwd_bf16 = jax.jit(functools.partial(fcnet_forward, use_bf16_matmul=True))
    out_bf16 = jax.block_until_ready(fwd_bf16(params, x20))
    assert jnp.allclose(out_bf16, fcnet_ref(params, x20), atol=5e-2, rtol=5e-2)

    # Case 4: deep config (11 layers) -> exercises the in-kernel fori_loop path.
    deep_params = init_fcnet_params(kd, input_dim, hidden, 10, output_dim)
    out_deep = jax.block_until_ready(jax.jit(fcnet_forward)(deep_params, x8))
    assert jnp.allclose(out_deep, fcnet_ref(deep_params, x8), atol=1e-4, rtol=1e-4)

    print("KERNEL_OK")
</pallas_src>

<mosaic_0001>
module attributes {stable_mosaic.version = 11 : i64} {
  func.func @_fcnet_fused_kernel(%arg0: i32, %arg1: memref<8x128xf32, #tpu.memory_space<vmem>>, %arg2: memref<4x128x128xf32, #tpu.memory_space<vmem>>, %arg3: memref<4x1x128xf32, #tpu.memory_space<vmem>>, %arg4: memref<8x128xf32, #tpu.memory_space<vmem>>) attributes {dimension_semantics = [#tpu.dimension_semantics<parallel>], iteration_bounds = array<i64: 1>, scalar_prefetch = 0 : i64, scratch_operands = 0 : i64, tpu.core_type = #tpu.core_type<tc>, window_params = [{transform_indices = @transform_0, window_bounds = array<i64: 8, 128>}, {pipeline_mode = #tpu.pipeline_mode<synchronous>, transform_indices = @transform_1, window_bounds = array<i64: 4, 128, 128>}, {pipeline_mode = #tpu.pipeline_mode<synchronous>, transform_indices = @transform_2, window_bounds = array<i64: 4, 1, 128>}, {transform_indices = @transform_3, window_bounds = array<i64: 8, 128>}]} {
    %c0 = arith.constant 0 : index
    %c0_0 = arith.constant 0 : index
    %0 = vector.load %arg1[%c0, %c0_0] : memref<8x128xf32, #tpu.memory_space<vmem>>, vector<8x128xf32>
    %c0_1 = arith.constant 0 : index
    %c0_2 = arith.constant 0 : index
    %c0_3 = arith.constant 0 : index
    %1 = vector.load %arg2[%c0_1, %c0_2, %c0_3] : memref<4x128x128xf32, #tpu.memory_space<vmem>>, vector<1x128x128xf32>
    %2 = vector.shape_cast %1 : vector<1x128x128xf32> to vector<128x128xf32>
    %c0_4 = arith.constant 0 : index
    %c0_5 = arith.constant 0 : index
    %c0_6 = arith.constant 0 : index
    %3 = vector.load %arg3[%c0_4, %c0_5, %c0_6] : memref<4x1x128xf32, #tpu.memory_space<vmem>>, vector<1x1x128xf32>
    %4 = vector.shape_cast %3 : vector<1x1x128xf32> to vector<1x128xf32>
    %cst = arith.constant dense<0.000000e+00> : vector<8x128xf32>
    %5 = tpu.matmul %0, %2, %cst {dimension_numbers = #tpu.dot_dimension_numbers<[1], [0], [0], [1], [0, 0, 1, 1], [], []>} : vector<8x128xf32>, vector<128x128xf32>, vector<8x128xf32> -> vector<8x128xf32>
    %6 = vector.broadcast %4 : vector<1x128xf32> to vector<8x128xf32>
    %7 = arith.addf %5, %6 : vector<8x128xf32>
    %cst_7 = arith.constant 0.000000e+00 : f32
    %8 = vector.broadcast %cst_7 : f32 to vector<8x128xf32>
    %9 = arith.maximumf %7, %8 : vector<8x128xf32>
    %c1 = arith.constant 1 : index
    %c0_8 = arith.constant 0 : index
    %c0_9 = arith.constant 0 : index
    %10 = vector.load %arg2[%c1, %c0_8, %c0_9] : memref<4x128x128xf32, #tpu.memory_space<vmem>>, vector<1x128x128xf32>
    %11 = vector.shape_cast %10 : vector<1x128x128xf32> to vector<128x128xf32>
    %c1_10 = arith.constant 1 : index
    %c0_11 = arith.constant 0 : index
    %c0_12 = arith.constant 0 : index
    %12 = vector.load %arg3[%c1_10, %c0_11, %c0_12] : memref<4x1x128xf32, #tpu.memory_space<vmem>>, vector<1x1x128xf32>
    %13 = vector.shape_cast %12 : vector<1x1x128xf32> to vector<1x128xf32>
    %cst_13 = arith.constant dense<0.000000e+00> : vector<8x128xf32>
    %14 = tpu.matmul %9, %11, %cst_13 {dimension_numbers = #tpu.dot_dimension_numbers<[1], [0], [0], [1], [0, 0, 1, 1], [], []>} : vector<8x128xf32>, vector<128x128xf32>, vector<8x128xf32> -> vector<8x128xf32>
    %15 = vector.broadcast %13 : vector<1x128xf32> to vector<8x128xf32>
    %16 = arith.addf %14, %15 : vector<8x128xf32>
    %cst_14 = arith.constant 0.000000e+00 : f32
    %17 = vector.broadcast %cst_14 : f32 to vector<8x128xf32>
    %18 = arith.maximumf %16, %17 : vector<8x128xf32>
    %c2 = arith.constant 2 : index
    %c0_15 = arith.constant 0 : index
    %c0_16 = arith.constant 0 : index
    %19 = vector.load %arg2[%c2, %c0_15, %c0_16] : memref<4x128x128xf32, #tpu.memory_space<vmem>>, vector<1x128x128xf32>
    %20 = vector.shape_cast %19 : vector<1x128x128xf32> to vector<128x128xf32>
    %c2_17 = arith.constant 2 : index
    %c0_18 = arith.constant 0 : index
    %c0_19 = arith.constant 0 : index
    %21 = vector.load %arg3[%c2_17, %c0_18, %c0_19] : memref<4x1x128xf32, #tpu.memory_space<vmem>>, vector<1x1x128xf32>
    %22 = vector.shape_cast %21 : vector<1x1x128xf32> to vector<1x128xf32>
    %cst_20 = arith.constant dense<0.000000e+00> : vector<8x128xf32>
    %23 = tpu.matmul %18, %20, %cst_20 {dimension_numbers = #tpu.dot_dimension_numbers<[1], [0], [0], [1], [0, 0, 1, 1], [], []>} : vector<8x128xf32>, vector<128x128xf32>, vector<8x128xf32> -> vector<8x128xf32>
    %24 = vector.broadcast %22 : vector<1x128xf32> to vector<8x128xf32>
    %25 = arith.addf %23, %24 : vector<8x128xf32>
    %cst_21 = arith.constant 0.000000e+00 : f32
    %26 = vector.broadcast %cst_21 : f32 to vector<8x128xf32>
    %27 = arith.maximumf %25, %26 : vector<8x128xf32>
    %c3 = arith.constant 3 : index
    %c0_22 = arith.constant 0 : index
    %c0_23 = arith.constant 0 : index
    %28 = vector.load %arg2[%c3, %c0_22, %c0_23] : memref<4x128x128xf32, #tpu.memory_space<vmem>>, vector<1x128x128xf32>
    %29 = vector.shape_cast %28 : vector<1x128x128xf32> to vector<128x128xf32>
    %c3_24 = arith.constant 3 : index
    %c0_25 = arith.constant 0 : index
    %c0_26 = arith.constant 0 : index
    %30 = vector.load %arg3[%c3_24, %c0_25, %c0_26] : memref<4x1x128xf32, #tpu.memory_space<vmem>>, vector<1x1x128xf32>
    %31 = vector.shape_cast %30 : vector<1x1x128xf32> to vector<1x128xf32>
    %cst_27 = arith.constant dense<0.000000e+00> : vector<8x128xf32>
    %32 = tpu.matmul %27, %29, %cst_27 {dimension_numbers = #tpu.dot_dimension_numbers<[1], [0], [0], [1], [0, 0, 1, 1], [], []>} : vector<8x128xf32>, vector<128x128xf32>, vector<8x128xf32> -> vector<8x128xf32>
    %33 = vector.broadcast %31 : vector<1x128xf32> to vector<8x128xf32>
    %34 = arith.addf %32, %33 : vector<8x128xf32>
    %c0_28 = arith.constant 0 : index
    %c0_29 = arith.constant 0 : index
    %35 = vector.load %arg4[%c0_28, %c0_29] : memref<8x128xf32, #tpu.memory_space<vmem>>, vector<8x128xf32>
    tpu.vector_store %arg4[%c0_28, %c0_29], %34 {strides = array<i32>} : memref<8x128xf32, #tpu.memory_space<vmem>>, vector<8x128xf32>,
    return
  }
  func.func @transform_0(%arg0: i32) -> (i32, i32) {
    %c0_i32 = arith.constant 0 : i32
    %c0_i32_0 = arith.constant 0 : i32
    return %arg0, %c0_i32 : i32, i32
  }
  func.func @transform_1(%arg0: i32) -> (i32, i32, i32) {
    %c0_i32 = arith.constant 0 : i32
    %c0_i32_0 = arith.constant 0 : i32
    %c0_i32_1 = arith.constant 0 : i32
    %c0_i32_2 = arith.constant 0 : i32
    return %c0_i32, %c0_i32_0, %c0_i32_1 : i32, i32, i32
  }
  func.func @transform_2(%arg0: i32) -> (i32, i32, i32) {
    %c0_i32 = arith.constant 0 : i32
    %c0_i32_0 = arith.constant 0 : i32
    %c0_i32_1 = arith.constant 0 : i32
    %c0_i32_2 = arith.constant 0 : i32
    return %c0_i32, %c0_i32_0, %c0_i32_1 : i32, i32, i32
  }
  func.func @transform_3(%arg0: i32) -> (i32, i32) {
    %c0_i32 = arith.constant 0 : i32
    %c0_i32_0 = arith.constant 0 : i32
    return %arg0, %c0_i32 : i32, i32
  }
}

</mosaic_0001>

<llo_original>
// kernel: fcnet_forward.1
$region0: #{fcnet_forward.1}
  #allocation0 [shape = 'u32[]', space=smem, size = 0x4, offset = 0x4, fixed_abs, tag = 'smem constant byte address 0x4 - core index']
  #allocation1 [shape = 'u32[72,128]{1,0:T(1,128)}', space=vmem, size = 0x9000, scoped, tag = 'internal scratch']
  %s0 = inlined_call_operand.vmem [shape: f32[8,128], index: 0, kind: input, shape index: {}]
  %s1 = inlined_call_operand.vmem [shape: f32[4,128,128], index: 1, kind: input, shape index: {}]
  %s2 = inlined_call_operand.vmem [shape: f32[4,1,128], index: 2, kind: input, shape index: {}]
  %s3 = inlined_call_operand.vmem [shape: f32[8,128], index: 3, kind: output, shape index: {}]
  %s4 = sld [smem:[#allocation0]]
  $region22: #{fcnet_forward.1} parent=0
    _
  %s6 = ssub.s32 1, %s4
  %s7 = scalar_select 0, %s6, %s4
  // Predicated region
  $region2: #{fcnet_forward.1} parent=0 // pred_check
    _
  $region3: #{fcnet_forward.1} parent=0 // pred_check_branch
    %9 = sbr.rel (0) target = $region5
  $region4: #{fcnet_forward.1} parent=0 // pred_region
    _
  $region5: #{fcnet_forward.1} parent=0 // pred_fallthru
    _
  // Predicated region
  $region6: #{fcnet_forward.1} parent=0 // pred_check
    _
  $region7: #{fcnet_forward.1} parent=0 // pred_check_branch
    %11 = sbr.rel (0) target = $region9
  $region8: #{fcnet_forward.1} parent=0 // pred_region
    _
  $region9: #{fcnet_forward.1} parent=0 // pred_fallthru
    _
  // Predicated region
  $region10: #{fcnet_forward.1} parent=0 // pred_check
    _
  $region11: #{fcnet_forward.1} parent=0 // pred_check_branch
    %13 = sbr.rel (0) target = $region13
  $region12: #{fcnet_forward.1} parent=0 // pred_region
    _
  $region13: #{fcnet_forward.1} parent=0 // pred_fallthru
    _
  %v14 = vld [vmem:[%s0] sm:$0xff]
  %v15 = vld [vmem:[%s1] sm:$0xff]
  %v16 = vld [vmem:[%s1 + $0x8] sm:$0xff]
  %v17 = vld [vmem:[%s1 + $0x10] sm:$0xff]
  %v18 = vld [vmem:[%s1 + $0x18] sm:$0xff]
  %v19 = vld [vmem:[%s1 + $0x20] sm:$0xff]
  %v20 = vld [vmem:[%s1 + $0x28] sm:$0xff]
  %v21 = vld [vmem:[%s1 + $0x30] sm:$0xff]
  %v22 = vld [vmem:[%s1 + $0x38] sm:$0xff]
  %v23 = vld [vmem:[%s1 + $0x40] sm:$0xff]
  %v24 = vld [vmem:[%s1 + $0x48] sm:$0xff]
  %v25 = vld [vmem:[%s1 + $0x50] sm:$0xff]
  %v26 = vld [vmem:[%s1 + $0x58] sm:$0xff]
  %v27 = vld [vmem:[%s1 + $0x60] sm:$0xff]
  %v28 = vld [vmem:[%s1 + $0x68] sm:$0xff]
  %v29 = vld [vmem:[%s1 + $0x70] sm:$0xff]
  %v30 = vld [vmem:[%s1 + $0x78] sm:$0xff]
  %v31 = vld [vmem:[%s2] sm:$0x1]
  %v33 = vperm.slane %v31, 0
  %35 = vmatpush.msra.mxu0 %v30
  %36 = vmatpush.msra.mxu0 %v29
  %37 = vmatpush.msra.mxu0 %v28
  %38 = vmatpush.msra.mxu0 %v27
  %39 = vmatpush.msra.mxu0 %v26
  %40 = vmatpush.msra.mxu0 %v25
  %41 = vmatpush.msra.mxu0 %v24
  %42 = vmatpush.msra.mxu0 %v23
  %43 = vmatpush.msra.mxu0 %v22
  %44 = vmatpush.msra.mxu0 %v21
  %45 = vmatpush.msra.mxu0 %v20
  %46 = vmatpush.msra.mxu0 %v19
  %47 = vmatpush.msra.mxu0 %v18
  %48 = vmatpush.msra.mxu0 %v17
  %49 = vmatpush.msra.mxu0 %v16
  %50 = vmatpush.msra.mxu0 %v15
  %51 = vmatmul.f32.gmra.mxu0 %v14
  %v52 = vpop.f32.mrf.mxu0
  %v53 = vadd.f32 %v33, %v52
  %54 = vdwg.mxu0
  %v55 = vmax.f32 %v53, 0.0
  %s56 = scalar_lea.vmem %s1, 128
  %v57 = vld [vmem:[%s56] sm:$0xff]
  %v58 = vld [vmem:[%s56 + $0x8] sm:$0xff]
  %v59 = vld [vmem:[%s56 + $0x10] sm:$0xff]
  %v60 = vld [vmem:[%s56 + $0x18] sm:$0xff]
  %v61 = vld [vmem:[%s56 + $0x20] sm:$0xff]
  %v62 = vld [vmem:[%s56 + $0x28] sm:$0xff]
  %v63 = vld [vmem:[%s56 + $0x30] sm:$0xff]
  %v64 = vld [vmem:[%s56 + $0x38] sm:$0xff]
  %v65 = vld [vmem:[%s56 + $0x40] sm:$0xff]
  %v66 = vld [vmem:[%s56 + $0x48] sm:$0xff]
  %v67 = vld [vmem:[%s56 + $0x50] sm:$0xff]
  %v68 = vld [vmem:[%s56 + $0x58] sm:$0xff]
  %v69 = vld [vmem:[%s56 + $0x60] sm:$0xff]
  %v70 = vld [vmem:[%s56 + $0x68] sm:$0xff]
  %v71 = vld [vmem:[%s56 + $0x70] sm:$0xff]
  %v72 = vld [vmem:[%s56 + $0x78] sm:$0xff]
  %s73 = scalar_lea.vmem %s2, 1
  %v74 = vld [vmem:[%s73] sm:$0x1]
  %v76 = vperm.slane %v74, 0
  %78 = vmatpush.msra.mxu0 %v72
  %79 = vmatpush.msra.mxu0 %v71
  %80 = vmatpush.msra.mxu0 %v70
  %81 = vmatpush.msra.mxu0 %v69
  %82 = vmatpush.msra.mxu0 %v68
  %83 = vmatpush.msra.mxu0 %v67
  %84 = vmatpush.msra.mxu0 %v66
  %85 = vmatpush.msra.mxu0 %v65
  %86 = vmatpush.msra.mxu0 %v64
  %87 = vmatpush.msra.mxu0 %v63
  %88 = vmatpush.msra.mxu0 %v62
  %89 = vmatpush.msra.mxu0 %v61
  %90 = vmatpush.msra.mxu0 %v60
  %91 = vmatpush.msra.mxu0 %v59
  %92 = vmatpush.msra.mxu0 %v58
  %93 = vmatpush.msra.mxu0 %v57
  %94 = vmatmul.f32.gmra.mxu0 %v55
  %v95 = vpop.f32.mrf.mxu0
  %v96 = vadd.f32 %v76, %v95
  %97 = vdwg.mxu0
  %v98 = vmax.f32 %v96, 0.0
  %s99 = scalar_lea.vmem %s1, 256
  %v100 = vld [vmem:[%s99] sm:$0xff]
  %v101 = vld [vmem:[%s99 + $0x8] sm:$0xff]
  %v102 = vld [vmem:[%s99 + $0x10] sm:$0xff]
  %v103 = vld [vmem:[%s99 + $0x18] sm:$0xff]
  %v104 = vld [vmem:[%s99 + $0x20] sm:$0xff]
  %v105 = vld [vmem:[%s99 + $0x28] sm:$0xff]
  %v106 = vld [vmem:[%s99 + $0x30] sm:$0xff]
  %v107 = vld [vmem:[%s99 + $0x38] sm:$0xff]
  %v108 = vld [vmem:[%s99 + $0x40] sm:$0xff]
  %v109 = vld [vmem:[%s99 + $0x48] sm:$0xff]
  %v110 = vld [vmem:[%s99 + $0x50] sm:$0xff]
  %v111 = vld [vmem:[%s99 + $0x58] sm:$0xff]
  %v112 = vld [vmem:[%s99 + $0x60] sm:$0xff]
  %v113 = vld [vmem:[%s99 + $0x68] sm:$0xff]
  %v114 = vld [vmem:[%s99 + $0x70] sm:$0xff]
  %v115 = vld [vmem:[%s99 + $0x78] sm:$0xff]
  %s116 = scalar_lea.vmem %s2, 2
  %v117 = vld [vmem:[%s116] sm:$0x1]
  %v119 = vperm.slane %v117, 0
  %121 = vmatpush.msra.mxu0 %v115
  %122 = vmatpush.msra.mxu0 %v114
  %123 = vmatpush.msra.mxu0 %v113
  %124 = vmatpush.msra.mxu0 %v112
  %125 = vmatpush.msra.mxu0 %v111
  %126 = vmatpush.msra.mxu0 %v110
  %127 = vmatpush.msra.mxu0 %v109
  %128 = vmatpush.msra.mxu0 %v108
  %129 = vmatpush.msra.mxu0 %v107
  %130 = vmatpush.msra.mxu0 %v106
  %131 = vmatpush.msra.mxu0 %v105
  %132 = vmatpush.msra.mxu0 %v104
  %133 = vmatpush.msra.mxu0 %v103
  %134 = vmatpush.msra.mxu0 %v102
  %135 = vmatpush.msra.mxu0 %v101
  %136 = vmatpush.msra.mxu0 %v100
  %137 = vmatmul.f32.gmra.mxu0 %v98
  %v138 = vpop.f32.mrf.mxu0
  %v139 = vadd.f32 %v119, %v138
  %140 = vdwg.mxu0
  %v141 = vmax.f32 %v139, 0.0
  %s142 = scalar_lea.vmem %s1, 384
  %v143 = vld [vmem:[%s142] sm:$0xff]
  %v144 = vld [vmem:[%s142 + $0x8] sm:$0xff]
  %v145 = vld [vmem:[%s142 + $0x10] sm:$0xff]
  %v146 = vld [vmem:[%s142 + $0x18] sm:$0xff]
  %v147 = vld [vmem:[%s142 + $0x20] sm:$0xff]
  %v148 = vld [vmem:[%s142 + $0x28] sm:$0xff]
  %v149 = vld [vmem:[%s142 + $0x30] sm:$0xff]
  %v150 = vld [vmem:[%s142 + $0x38] sm:$0xff]
  %v151 = vld [vmem:[%s142 + $0x40] sm:$0xff]
  %v152 = vld [vmem:[%s142 + $0x48] sm:$0xff]
  %v153 = vld [vmem:[%s142 + $0x50] sm:$0xff]
  %v154 = vld [vmem:[%s142 + $0x58] sm:$0xff]
  %v155 = vld [vmem:[%s142 + $0x60] sm:$0xff]
  %v156 = vld [vmem:[%s142 + $0x68] sm:$0xff]
  %v157 = vld [vmem:[%s142 + $0x70] sm:$0xff]
  %v158 = vld [vmem:[%s142 + $0x78] sm:$0xff]
  %s159 = scalar_lea.vmem %s2, 3
  %v160 = vld [vmem:[%s159] sm:$0x1]
  %v162 = vperm.slane %v160, 0
  %164 = vmatpush.msra.mxu0 %v158
  %165 = vmatpush.msra.mxu0 %v157
  %166 = vmatpush.msra.mxu0 %v156
  %167 = vmatpush.msra.mxu0 %v155
  %168 = vmatpush.msra.mxu0 %v154
  %169 = vmatpush.msra.mxu0 %v153
  %170 = vmatpush.msra.mxu0 %v152
  %171 = vmatpush.msra.mxu0 %v151
  %172 = vmatpush.msra.mxu0 %v150
  %173 = vmatpush.msra.mxu0 %v149
  %174 = vmatpush.msra.mxu0 %v148
  %175 = vmatpush.msra.mxu0 %v147
  %176 = vmatpush.msra.mxu0 %v146
  %177 = vmatpush.msra.mxu0 %v145
  %178 = vmatpush.msra.mxu0 %v144
  %179 = vmatpush.msra.mxu0 %v143
  %180 = vmatmul.f32.gmra.mxu0 %v141
  %v181 = vpop.f32.mrf.mxu0
  %v182 = vadd.f32 %v162, %v181
  %183 = vdwg.mxu0
  %184 = vst [vmem:[%s3] sm:$0xff] %v182
  // Predicated region
  $region14: #{fcnet_forward.1} parent=0 // pred_check
    _
  $region15: #{fcnet_forward.1} parent=0 // pred_check_branch
    %186 = sbr.rel (0) target = $region17
  $region16: #{fcnet_forward.1} parent=0 // pred_region
    _
  $region17: #{fcnet_forward.1} parent=0 // pred_fallthru
    _
  // Predicated region
  $region18: #{fcnet_forward.1} parent=0 // pred_check
    _
  $region19: #{fcnet_forward.1} parent=0 // pred_check_branch
    %188 = sbr.rel (0) target = $region21
  $region20: #{fcnet_forward.1} parent=0 // pred_region
    _
  $region21: #{fcnet_forward.1} parent=0 // pred_fallthru
    _

</llo_original>
